<compile_context>
chip_gen: v7x
topology: tpu7x:2x2x1
jax: 0.10.0
libtpu: 0.0.40
codegen_flags: <defaults>
</compile_context>

<pallas_src>
import functools

import jax
import jax.numpy as jnp
from jax import lax
from jax.experimental import pallas as pl
from jax.experimental.pallas import tpu as pltpu

EPS = float(jnp.finfo(jnp.float32).eps)
LN2 = float(jnp.log(2.0))
LANES = 128
SUBLANES = 8


def _tensorcores_per_chip():
    """Best-effort TensorCores-per-device: 2 on v4/v5p/v7x (megacore), else 1."""
    try:
        kind = jax.devices()[0].device_kind.lower()
    except Exception:
        return 1
    if "lite" in kind or "v5e" in kind or "v6" in kind:
        return 1
    if "v4" in kind or "v5p" in kind or "v5 p" in kind or "v7" in kind or "7x" in kind:
        return 2
    return 1


def _logcosh_partial_kernel(yh_ref, y_ref, o_ref, *, tm, tiles_per_shard,
                            last_block, rows):
    s = pl.program_id(0)            # shard axis (parallel -> both TCs on v7x)
    k = pl.program_id(1)            # tile within shard (reduction, arbitrary)
    blk = s * tiles_per_shard + k   # global (unclamped) row-tile index

    @pl.when(k == 0)
    def _():
        o_ref[...] = jnp.zeros_like(o_ref)

    def accumulate(mask_tail):
        x = yh_ref[...].astype(jnp.float32) - y_ref[...].astype(jnp.float32) + EPS
        ax = jnp.abs(x)
        # log(cosh(x)) + log(2) = |x| + log1p(exp(-2|x|))  (overflow-safe; the
        # constant -log(2) per element is folded into the wrapper's mean).
        val = ax + jnp.log1p(jnp.exp(-2.0 * ax))
        if mask_tail:
            # Per-tile valid-row bound (int32-safe; no global flat index).
            # <= 0 for fully-masked duplicate tiles fed by the clamped
            # index_map when the shards don't divide tiles_total evenly.
            valid_rows = jnp.int32(rows) - blk * tm
            row = lax.broadcasted_iota(jnp.int32, (tm, LANES), 0)
            val = jnp.where(row < valid_rows, val, 0.0)
        # (tm, 128) -> (tm//8, 8, 128), sum over leading axis: pure-VPU adds
        # into the resident (8, 128) accumulator block.
        o_ref[...] += val.reshape(tm // SUBLANES, SUBLANES, LANES).sum(axis=0)

    is_edge = blk >= last_block

    @pl.when(jnp.logical_not(is_edge))
    def _():
        accumulate(False)

    @pl.when(is_edge)
    def _():
        accumulate(True)


def log_cosh_loss(y_hat, y, *, block_bytes=2 * 1024 * 1024, max_shards=None):
    """mean(log(cosh(y_hat - y + eps))) — matches PyTorch LogCoshLoss.forward."""
    assert y_hat.shape == y.shape
    n = int(y_hat.size)
    assert n > 0

    yh = jnp.ravel(y_hat)   # free reshape for contiguous inputs
    yy = jnp.ravel(y)

    # Kernel handles the 128-aligned prefix; the (< 128 element) remainder is a
    # tiny plain-JAX expression.  If fewer than one (8,128) tile remains, do
    # everything in plain JAX.
    n_main = (n // LANES) * LANES
    if n_main < SUBLANES * LANES:
        n_main = 0
    n_tail = n - n_main

    tail_sum = jnp.float32(0.0)
    if n_tail:
        xt = yh[n_main:].astype(jnp.float32) - yy[n_main:].astype(jnp.float32) + EPS
        axt = jnp.abs(xt)
        tail_sum = jnp.sum(axt + jnp.log1p(jnp.exp(-2.0 * axt)))

    if n_main == 0:
        return (tail_sum / n - LN2).astype(jnp.float32)

    rows = n_main // LANES
    if n_tail:
        # Rare path (n % 128 != 0): the prefix slice below is the only copy —
        # no full-array jnp.pad of both operands.
        yh2 = yh[:n_main].reshape(rows, LANES)
        yy2 = yy[:n_main].reshape(rows, LANES)
    else:
        # Common path: pure reshape, no copy of the operands before pallas_call.
        yh2 = yh.reshape(rows, LANES)
        yy2 = yy.reshape(rows, LANES)

    # Byte-budgeted row tile: `block_bytes` per input block (bf16 inputs get 2x
    # the rows for the same bytes).  Always a multiple of 8 and <= rows.
    bytes_per_row = LANES * max(yh2.dtype.itemsize, yy2.dtype.itemsize)
    tm_budget = max(SUBLANES, (block_bytes // bytes_per_row) // SUBLANES * SUBLANES)
    tm = min(tm_budget, (rows // SUBLANES) * SUBLANES)

    tiles_total = pl.cdiv(rows, tm)
    if max_shards is None:
        max_shards = _tensorcores_per_chip()      # 2 only where 2 TCs exist
    n_shards = max(1, min(max_shards, tiles_total))
    tiles_per_shard = pl.cdiv(tiles_total, n_shards)

    # Explicit scoped-VMEM budget: 2 pipeline buffers per input + a few f32
    # temporaries for the element-wise chain / reduce + headroom for Mosaic
    # internals; capped at 32 MiB so it is safe on v5e/v6e/v7x alike.
    in_block_bytes = tm * LANES * (yh2.dtype.itemsize + yy2.dtype.itemsize)
    f32_block_bytes = tm * LANES * 4
    vmem_limit = int(min(32 * 1024 * 1024,
                         2 * in_block_bytes + 4 * f32_block_bytes + (4 << 20)))

    kernel = functools.partial(
        _logcosh_partial_kernel,
        tm=tm,
        tiles_per_shard=tiles_per_shard,
        last_block=tiles_total - 1,
        rows=rows,
    )

    def in_map(s, k):
        blk = s * tiles_per_shard + k
        # Clamp so duplicate tiles past the end (when tiles_total doesn't split
        # evenly across shards) re-read the last real tile; they are fully
        # masked to zero inside the kernel.
        return (jnp.minimum(blk, tiles_total - 1), 0)

    partials = pl.pallas_call(
        kernel,
        out_shape=jax.ShapeDtypeStruct((n_shards * SUBLANES, LANES), jnp.float32),
        grid_spec=pltpu.PrefetchScalarGridSpec(
            num_scalar_prefetch=0,
            grid=(n_shards, tiles_per_shard),
            in_specs=[
                pl.BlockSpec((tm, LANES), in_map),
                pl.BlockSpec((tm, LANES), in_map),
            ],
            out_specs=pl.BlockSpec((SUBLANES, LANES), lambda s, k: (s, 0)),
        ),
        compiler_params=pltpu.CompilerParams(
            dimension_semantics=("parallel", "arbitrary"),
            vmem_limit_bytes=vmem_limit,
        ),
    )(yh2, yy2)

    # Single cross-lane reduction + mean outside the hot loop; the per-element
    # log(2) shift is removed here with one scalar subtract.
    total = jnp.sum(partials) + tail_sum
    return (total / n - LN2).astype(jnp.float32)


if __name__ == "__main__":
    key = jax.random.PRNGKey(0)
    k1, k2, k3, k4 = jax.random.split(key, 4)

    # Small NCHW-shaped regression targets/predictions (128-aligned size).
    y_hat = jax.random.normal(k1, (2, 4, 16, 16), dtype=jnp.float32)
    y = jax.random.normal(k2, (2, 4, 16, 16), dtype=jnp.float32)
    loss = log_cosh_loss(y_hat, y)
    jax.block_until_ready(loss)
    ref = jnp.mean(jnp.log(jnp.cosh(y_hat - y + EPS)))
    assert jnp.allclose(loss, ref, rtol=1e-5, atol=1e-6), (loss, ref)

    # Unaligned size (n % 128 != 0, rows % tm != 0): exercises the in-kernel
    # partial-tile mask and the plain-JAX tail path.
    y_hat2 = jax.random.normal(k3, (3, 7, 62), dtype=jnp.float32)
    y2 = jax.random.normal(k4, (3, 7, 62), dtype=jnp.float32)
    loss2 = log_cosh_loss(y_hat2, y2)
    jax.block_until_ready(loss2)
    ref2 = jnp.mean(jnp.log(jnp.cosh(y_hat2 - y2 + EPS)))
    assert jnp.allclose(loss2, ref2, rtol=1e-5, atol=1e-6), (loss2, ref2)

    print("KERNEL_OK")
</pallas_src>

<mosaic_0001>
module attributes {stable_mosaic.version = 11 : i64} {
  func.func @_logcosh_partial_kernel(%arg0: i32, %arg1: i32, %arg2: memref<16x128xf32, #tpu.memory_space<vmem>>, %arg3: memref<16x128xf32, #tpu.memory_space<vmem>>, %arg4: memref<8x128xf32, #tpu.memory_space<vmem>>) attributes {dimension_semantics = [#tpu.dimension_semantics<parallel>, #tpu.dimension_semantics<arbitrary>], iteration_bounds = array<i64: 1, 1>, scalar_prefetch = 0 : i64, scratch_operands = 0 : i64, tpu.core_type = #tpu.core_type<tc>, window_params = [{transform_indices = @transform_0, window_bounds = array<i64: 16, 128>}, {transform_indices = @transform_1, window_bounds = array<i64: 16, 128>}, {transform_indices = @transform_2, window_bounds = array<i64: 8, 128>}]} {
    %c1_i32 = arith.constant 1 : i32
    %0 = arith.muli %arg0, %c1_i32 : i32
    %1 = arith.addi %0, %arg1 : i32
    %c0_i32 = arith.constant 0 : i32
    %2 = arith.cmpi eq, %arg1, %c0_i32 : i32
    %3 = arith.extui %2 : i1 to i32
    %c0_i32_0 = arith.constant 0 : i32
    %4 = arith.cmpi ne, %3, %c0_i32_0 : i32
    scf.if %4 {
      %cst = arith.constant 0.000000e+00 : f32
      %11 = vector.broadcast %cst : f32 to vector<8x128xf32>
      %c0 = arith.constant 0 : index
      %c0_4 = arith.constant 0 : index
      %12 = vector.load %arg4[%c0, %c0_4] : memref<8x128xf32, #tpu.memory_space<vmem>>, vector<8x128xf32>
      tpu.vector_store %arg4[%c0, %c0_4], %11 {strides = array<i32>} : memref<8x128xf32, #tpu.memory_space<vmem>>, vector<8x128xf32>,
    } else {
    }
    %c0_i32_1 = arith.constant 0 : i32
    %5 = arith.cmpi sge, %1, %c0_i32_1 : i32
    %true = arith.constant true
    %6 = arith.xori %5, %true : i1
    %7 = arith.extui %6 : i1 to i32
    %c0_i32_2 = arith.constant 0 : i32
    %8 = arith.cmpi ne, %7, %c0_i32_2 : i32
    scf.if %8 {
      %c0 = arith.constant 0 : index
      %c0_4 = arith.constant 0 : index
      %11 = vector.load %arg2[%c0, %c0_4] : memref<16x128xf32, #tpu.memory_space<vmem>>, vector<16x128xf32>
      %c0_5 = arith.constant 0 : index
      %c0_6 = arith.constant 0 : index
      %12 = vector.load %arg3[%c0_5, %c0_6] : memref<16x128xf32, #tpu.memory_space<vmem>>, vector<16x128xf32>
      %13 = arith.subf %11, %12 : vector<16x128xf32>
      %cst = arith.constant 1.1920929E-7 : f32
      %14 = vector.broadcast %cst : f32 to vector<16x128xf32>
      %15 = arith.addf %13, %14 : vector<16x128xf32>
      %16 = math.absf %15 : vector<16x128xf32>
      %cst_7 = arith.constant -2.000000e+00 : f32
      %17 = vector.broadcast %cst_7 : f32 to vector<16x128xf32>
      %18 = arith.mulf %17, %16 : vector<16x128xf32>
      %19 = math.exp %18 : vector<16x128xf32>
      %20 = math.log1p %19 : vector<16x128xf32>
      %21 = arith.addf %16, %20 : vector<16x128xf32>
      %c0_8 = arith.constant 0 : index
      %c0_9 = arith.constant 0 : index
      %22 = vector.load %arg4[%c0_8, %c0_9] : memref<8x128xf32, #tpu.memory_space<vmem>>, vector<8x128xf32>
      %23 = vector.shape_cast %21 : vector<16x128xf32> to vector<2x8x128xf32>
      %cst_10 = arith.constant dense<0.000000e+00> : vector<8x128xf32>
      %24 = vector.multi_reduction <add>, %23, %cst_10 [0] : vector<2x8x128xf32> to vector<8x128xf32>
      %25 = arith.addf %22, %24 : vector<8x128xf32>
      %c0_11 = arith.constant 0 : index
      %c0_12 = arith.constant 0 : index
      %26 = vector.load %arg4[%c0_11, %c0_12] : memref<8x128xf32, #tpu.memory_space<vmem>>, vector<8x128xf32>
      tpu.vector_store %arg4[%c0_11, %c0_12], %25 {strides = array<i32>} : memref<8x128xf32, #tpu.memory_space<vmem>>, vector<8x128xf32>,
    } else {
    }
    %9 = arith.extui %5 : i1 to i32
    %c0_i32_3 = arith.constant 0 : i32
    %10 = arith.cmpi ne, %9, %c0_i32_3 : i32
    scf.if %10 {
      %c0 = arith.constant 0 : index
      %c0_4 = arith.constant 0 : index
      %11 = vector.load %arg2[%c0, %c0_4] : memref<16x128xf32, #tpu.memory_space<vmem>>, vector<16x128xf32>
      %c0_5 = arith.constant 0 : index
      %c0_6 = arith.constant 0 : index
      %12 = vector.load %arg3[%c0_5, %c0_6] : memref<16x128xf32, #tpu.memory_space<vmem>>, vector<16x128xf32>
      %13 = arith.subf %11, %12 : vector<16x128xf32>
      %cst = arith.constant 1.1920929E-7 : f32
      %14 = vector.broadcast %cst : f32 to vector<16x128xf32>
      %15 = arith.addf %13, %14 : vector<16x128xf32>
      %16 = math.absf %15 : vector<16x128xf32>
      %cst_7 = arith.constant -2.000000e+00 : f32
      %17 = vector.broadcast %cst_7 : f32 to vector<16x128xf32>
      %18 = arith.mulf %17, %16 : vector<16x128xf32>
      %19 = math.exp %18 : vector<16x128xf32>
      %20 = math.log1p %19 : vector<16x128xf32>
      %21 = arith.addf %16, %20 : vector<16x128xf32>
      %c16_i32 = arith.constant 16 : i32
      %22 = arith.muli %1, %c16_i32 : i32
      %c16_i32_8 = arith.constant 16 : i32
      %23 = arith.subi %c16_i32_8, %22 : i32
      %24 = tpu.iota {dimensions = array<i32: 0>} : vector<16x128xi32>
      %25 = vector.broadcast %23 : i32 to vector<16x128xi32>
      %26 = arith.cmpi slt, %24, %25 : vector<16x128xi32>
      %cst_9 = arith.constant 0.000000e+00 : f32
      %27 = vector.broadcast %cst_9 : f32 to vector<16x128xf32>
      %28 = arith.select %26, %21, %27 : vector<16x128xi1>, vector<16x128xf32>
      %c0_10 = arith.constant 0 : index
      %c0_11 = arith.constant 0 : index
      %29 = vector.load %arg4[%c0_10, %c0_11] : memref<8x128xf32, #tpu.memory_space<vmem>>, vector<8x128xf32>
      %30 = vector.shape_cast %28 : vector<16x128xf32> to vector<2x8x128xf32>
      %cst_12 = arith.constant dense<0.000000e+00> : vector<8x128xf32>
      %31 = vector.multi_reduction <add>, %30, %cst_12 [0] : vector<2x8x128xf32> to vector<8x128xf32>
      %32 = arith.addf %29, %31 : vector<8x128xf32>
      %c0_13 = arith.constant 0 : index
      %c0_14 = arith.constant 0 : index
      %33 = vector.load %arg4[%c0_13, %c0_14] : memref<8x128xf32, #tpu.memory_space<vmem>>, vector<8x128xf32>
      tpu.vector_store %arg4[%c0_13, %c0_14], %32 {strides = array<i32>} : memref<8x128xf32, #tpu.memory_space<vmem>>, vector<8x128xf32>,
    } else {
    }
    return
  }
  func.func @transform_0(%arg0: i32, %arg1: i32) -> (i32, i32) {
    %c1_i32 = arith.constant 1 : i32
    %0 = arith.muli %arg0, %c1_i32 : i32
    %1 = arith.addi %0, %arg1 : i32
    %c0_i32 = arith.constant 0 : i32
    %2 = arith.minsi %1, %c0_i32 : i32
    %c0_i32_0 = arith.constant 0 : i32
    %c0_i32_1 = arith.constant 0 : i32
    return %2, %c0_i32_0 : i32, i32
  }
  func.func @transform_1(%arg0: i32, %arg1: i32) -> (i32, i32) {
    %c1_i32 = arith.constant 1 : i32
    %0 = arith.muli %arg0, %c1_i32 : i32
    %1 = arith.addi %0, %arg1 : i32
    %c0_i32 = arith.constant 0 : i32
    %2 = arith.minsi %1, %c0_i32 : i32
    %c0_i32_0 = arith.constant 0 : i32
    %c0_i32_1 = arith.constant 0 : i32
    return %2, %c0_i32_0 : i32, i32
  }
  func.func @transform_2(%arg0: i32, %arg1: i32) -> (i32, i32) {
    %c0_i32 = arith.constant 0 : i32
    %c0_i32_0 = arith.constant 0 : i32
    return %arg0, %c0_i32 : i32, i32
  }
}

</mosaic_0001>

<llo_original>
// kernel: tpu_custom_call.1
$region0: #{tpu_custom_call.1}
  #allocation0 [shape = 'u32[]', space=smem, size = 0x4, offset = 0x4, fixed_abs, tag = 'smem constant byte address 0x4 - core index']
  #allocation1 [shape = 'u32[144,128]{1,0:T(1,128)}', space=vmem, size = 0x12000, scoped, tag = 'internal scratch']
  %s0 = inlined_call_operand.hbm [shape: f32[16,128], index: 0, kind: input, shape index: {}]
  %s1 = inlined_call_operand.hbm [shape: f32[16,128], index: 1, kind: input, shape index: {}]
  %s2 = inlined_call_operand.hbm [shape: f32[8,128], index: 2, kind: output, shape index: {}]
  %s3 = sld [smem:[#allocation0]]
  $region38: #{tpu_custom_call.1} parent=0
    _
  %s5 = ssub.s32 1, %s3
  %s6 = scalar_select 0, %s5, %s3
  $region1: #{tpu_custom_call.1} parent=0
    #allocation2 [shape = 'u8[8192]{0}', space=vmem, size = 0x2000, scoped, tag = 'input window, operand 0, single buffered']
    #allocation3 [shape = 's32[1]{0}', space=sflag, size = 0x4, scoped, tag = 'scoped memory for tpu_custom_call.1']
    #allocation4 [shape = 's32[1]{0}', space=sflag, size = 0x4, scoped, tag = 'scoped memory for tpu_custom_call.1']
    #allocation5 [shape = 'u8[8192]{0}', space=vmem, size = 0x2000, scoped, tag = 'input window, operand 1, single buffered']
    #allocation6 [shape = 's32[1]{0}', space=sflag, size = 0x4, scoped, tag = 'scoped memory for tpu_custom_call.1']
    #allocation7 [shape = 'u8[4096]{0}', space=vmem, size = 0x1000, scoped, tag = 'output window, operand 0, single buffered']
    %7 = vsyncpa [#allocation3], 0
    %8 = vsyncpa [#allocation6], 0
    %9 = vsyncpa [#allocation4], 0
    // Predicated region
    $region2: #{tpu_custom_call.1} parent=1 // pred_check
      _
    $region3: #{tpu_custom_call.1} parent=1 // pred_check_branch
      %11 = sbr.rel (0) target = $region5
    $region4: #{tpu_custom_call.1} parent=1 // pred_region
      %s12 = sadd.s32 0, 0
      %p13 = scmp.lt.s32.totalorder %s12, 0
      %s14 = scalar_select %p13, %s12, 0
      %s15 = smul.u32 2, %s14
      %s17 = ssub.s32 256, 256
      %18 = vsyncadd [#allocation3], %s17
      %s19 = smul.addr %s15, 128
      %s20 = scalar_lea.hbm %s0, %s19
      %s21 = sshll.u32 [#allocation2], 4
      %s22 = int_to_ptr.vmem [resolvable:$true] %s21
      %27 = dma.hbm_to_vmem [thread:$0]  %s20, 256, %s22, [#allocation3], 128, 128, 8
    $region5: #{tpu_custom_call.1} parent=1 // pred_fallthru
      _
    // Predicated region
    $region6: #{tpu_custom_call.1} parent=1 // pred_check
      _
    $region7: #{tpu_custom_call.1} parent=1 // pred_check_branch
      %29 = sbr.rel (0) target = $region9
    $region8: #{tpu_custom_call.1} parent=1 // pred_region
      %s30 = sadd.s32 0, 0
      %p31 = scmp.lt.s32.totalorder %s30, 0
      %s32 = scalar_select %p31, %s30, 0
      %s33 = smul.u32 2, %s32
      %s35 = ssub.s32 256, 256
      %36 = vsyncadd [#allocation6], %s35
      %s37 = smul.addr %s33, 128
      %s38 = scalar_lea.hbm %s1, %s37
      %s39 = sshll.u32 [#allocation5], 4
      %s40 = int_to_ptr.vmem [resolvable:$true] %s39
      %45 = dma.hbm_to_vmem [thread:$0]  %s38, 256, %s40, [#allocation6], 128, 128, 8
    $region9: #{tpu_custom_call.1} parent=1 // pred_fallthru
      _
    // Predicated region
    $region10: #{tpu_custom_call.1} parent=1 // pred_check
      _
    $region11: #{tpu_custom_call.1} parent=1 // pred_check_branch
      %47 = sbr.rel (0) target = $region13
    $region12: #{tpu_custom_call.1} parent=1 // pred_region
      %48 = dma.done [#allocation3], 256
    $region13: #{tpu_custom_call.1} parent=1 // pred_fallthru
      _
    // Predicated region
    $region14: #{tpu_custom_call.1} parent=1 // pred_check
      _
    $region15: #{tpu_custom_call.1} parent=1 // pred_check_branch
      %50 = sbr.rel (0) target = $region17
    $region16: #{tpu_custom_call.1} parent=1 // pred_region
      %51 = dma.done [#allocation6], 256
    $region17: #{tpu_custom_call.1} parent=1 // pred_fallthru
      _
    %s52 = sadd.s32 0, 0
    %p53 = scmp.lt.s32.totalorder %s52, 0
    %s54 = scalar_select %p53, %s52, 0
    %s55 = smul.u32 2, %s54
    %s56 = sadd.s32 0, 0
    %p57 = scmp.lt.s32.totalorder %s56, 0
    %s58 = scalar_select %p57, %s56, 0
    %s59 = smul.u32 2, %s58
    %s60 = sadd.s32 0, 0
    %p61 = scmp.eq.s32.totalorder 0, 0
    // Predicated region
    $region18: #{tpu_custom_call.1} parent=1 // pred_check
      %p62 = pneg %p61
    $region19: #{tpu_custom_call.1} parent=1 // pred_check_branch
      %64 = sbr.rel (%p62) target = $region21
    $region20: #{tpu_custom_call.1} parent=1 // pred_region
      %65 = vst [vmem:[#allocation7] sm:$0xff] 0.0
    $region21: #{tpu_custom_call.1} parent=1 // pred_fallthru
      _
    %p66 = scmp.ge.s32.totalorder %s60, 0
    %p67 = scmp.lt.s32.totalorder %s60, 0
    // Predicated region
    $region22: #{tpu_custom_call.1} parent=1 // pred_check
      %p68 = pneg %p67
    $region23: #{tpu_custom_call.1} parent=1 // pred_check_branch
      %70 = sbr.rel (%p68) target = $region25
    $region24: #{tpu_custom_call.1} parent=1 // pred_region
      %v71 = vld [vmem:[#allocation2] sm:$0xff]
      %v72 = vld [vmem:[#allocation2 + $0x8] sm:$0xff]
      %v73 = vld [vmem:[#allocation5] sm:$0xff]
      %v74 = vld [vmem:[#allocation5 + $0x8] sm:$0xff]
      %v75 = vsub.f32 %v71, %v73
      %v76 = vsub.f32 %v72, %v74
      %v77 = vadd.f32 %v75, 1.1920929e-07
      %v78 = vadd.f32 %v76, 1.1920929e-07
      %v79 = vand.u32 2147483647, %v77
      %v80 = vand.u32 2147483647, %v78
      %v81 = vmul.f32 %v79, -2.0
      %v82 = vmul.f32 %v80, -2.0
      %v83 = vmul.f32 %v81, 1.442695
      %v84 = vpow.pop %v83
      %v85 = vmul.f32 %v82, 1.442695
      %v86 = vpow.pop %v85
      %v87 = vadd.f32 %v84, 1.0
      %v88 = vlog2.pop %v87
      %v89 = vmul.f32 %v88, 0.6931472
      %v90 = vmul.f32 -0.5, %v84
      %v91 = vadd.f32 %v90, 1.0
      %v92 = vmul.f32 %v91, %v84
      %v93 = vand.u32 2147483647, %v84
      %vm94 = vcmp.lt.f32.partialorder %v93, 0.0004427343
      %v95 = vsel %vm94, %v92, %v89
      %v96 = vadd.f32 %v86, 1.0
      %v97 = vlog2.pop %v96
      %v98 = vmul.f32 %v97, 0.6931472
      %v99 = vmul.f32 -0.5, %v86
      %v100 = vadd.f32 %v99, 1.0
      %v101 = vmul.f32 %v100, %v86
      %v102 = vand.u32 2147483647, %v86
      %vm103 = vcmp.lt.f32.partialorder %v102, 0.0004427343
      %v104 = vsel %vm103, %v101, %v98
      %v105 = vadd.f32 %v79, %v95
      %v106 = vadd.f32 %v80, %v104
      %v107 = vld [vmem:[#allocation7] sm:$0xff]
      %v108 = vadd.f32 %v105, %v106
      %v109 = vadd.f32 %v107, %v108
      %110 = vst [vmem:[#allocation7] sm:$0xff] %v109
    $region25: #{tpu_custom_call.1} parent=1 // pred_fallthru
      _
    // Predicated region
    $region26: #{tpu_custom_call.1} parent=1 // pred_check
      %p111 = pneg %p66
    $region27: #{tpu_custom_call.1} parent=1 // pred_check_branch
      %113 = sbr.rel (%p111) target = $region29
    $region28: #{tpu_custom_call.1} parent=1 // pred_region
      %v114 = vld [vmem:[#allocation2] sm:$0xff]
      %v115 = vld [vmem:[#allocation2 + $0x8] sm:$0xff]
      %v116 = vld [vmem:[#allocation5] sm:$0xff]
      %v117 = vld [vmem:[#allocation5 + $0x8] sm:$0xff]
      %v118 = vsub.f32 %v114, %v116
      %v119 = vsub.f32 %v115, %v117
      %v120 = vadd.f32 %v118, 1.1920929e-07
      %v121 = vadd.f32 %v119, 1.1920929e-07
      %v122 = vand.u32 2147483647, %v120
      %v123 = vand.u32 2147483647, %v121
      %v124 = vmul.f32 %v122, -2.0
      %v125 = vmul.f32 %v123, -2.0
      %v126 = vmul.f32 %v124, 1.442695
      %v127 = vpow.pop %v126
      %v128 = vmul.f32 %v125, 1.442695
      %v129 = vpow.pop %v128
      %v130 = vadd.f32 %v127, 1.0
      %v131 = vlog2.pop %v130
      %v132 = vmul.f32 %v131, 0.6931472
      %v133 = vmul.f32 -0.5, %v127
      %v134 = vadd.f32 %v133, 1.0
      %v135 = vmul.f32 %v134, %v127
      %v136 = vand.u32 2147483647, %v127
      %vm137 = vcmp.lt.f32.partialorder %v136, 0.0004427343
      %v138 = vsel %vm137, %v135, %v132
      %v139 = vadd.f32 %v129, 1.0
      %v140 = vlog2.pop %v139
      %v141 = vmul.f32 %v140, 0.6931472
      %v142 = vmul.f32 -0.5, %v129
      %v143 = vadd.f32 %v142, 1.0
      %v144 = vmul.f32 %v143, %v129
      %v145 = vand.u32 2147483647, %v129
      %vm146 = vcmp.lt.f32.partialorder %v145, 0.0004427343
      %v147 = vsel %vm146, %v144, %v141
      %v148 = vadd.f32 %v122, %v138
      %v149 = vadd.f32 %v123, %v147
      %s150 = smul.u32 %s60, 16
      %s151 = ssub.s32 16, %s150
      %v152 = vlaneseq
      %v153 = vshrl.u32 %v152, 7
      %v154 = vadd.s32 %v153, 8
      %v155 = vstv %s151
      %vm156 = vcmp.lt.s32.totalorder %v153, %v155
      %vm157 = vcmp.lt.s32.totalorder %v154, %v155
      %v158 = vsel %vm156, %v148, 0.0
      %v159 = vsel %vm157, %v149, 0.0
      %v160 = vld [vmem:[#allocation7] sm:$0xff]
      %v161 = vadd.f32 %v158, %v159
      %v162 = vadd.f32 %v160, %v161
      %163 = vst [vmem:[#allocation7] sm:$0xff] %v162
    $region29: #{tpu_custom_call.1} parent=1 // pred_fallthru
      _
    // Predicated region
    $region30: #{tpu_custom_call.1} parent=1 // pred_check
      _
    $region31: #{tpu_custom_call.1} parent=1 // pred_check_branch
      %165 = sbr.rel (0) target = $region33
    $region32: #{tpu_custom_call.1} parent=1 // pred_region
      %s167 = ssub.s32 128, 128
      %168 = vsyncadd [#allocation4], %s167
      %s170 = sshll.u32 [#allocation7], 4
      %s171 = int_to_ptr.vmem [resolvable:$true] %s170
      %173 = dma.vmem_to_hbm [thread:$0]  %s171, 128, %s2, [#allocation4]
    $region33: #{tpu_custom_call.1} parent=1 // pred_fallthru
      _
    // Predicated region
    $region34: #{tpu_custom_call.1} parent=1 // pred_check
      _
    $region35: #{tpu_custom_call.1} parent=1 // pred_check_branch
      %175 = sbr.rel (0) target = $region37
    $region36: #{tpu_custom_call.1} parent=1 // pred_region
      %176 = dma.done [#allocation4], 128
    $region37: #{tpu_custom_call.1} parent=1 // pred_fallthru
      _
    %177 = vsyncpa [#allocation3], 1
    %178 = vsyncpa [#allocation6], 1
    %179 = vsyncpa [#allocation4], 1

</llo_original>
